<compile_context>
chip_gen: v7x
topology: tpu7x:2x2x1
jax: 0.10.0
libtpu: 0.0.40
codegen_flags: <defaults>
</compile_context>

<pallas_src>
import jax
import jax.numpy as jnp
from jax import lax
from jax.experimental import pallas as pl
from jax.experimental.pallas import tpu as pltpu

IN_F, H1, H2, OUT_F = 83, 64, 16, 1


def _round_up(n, m):
    return ((n + m - 1) // m) * m


def qnet_kernel(x_ref, w1_ref, b1_ref, w2_ref, b2_ref, w3_ref, b3_ref, o_ref):
    # fc1 + relu: (tb, 83) @ (83, 64) -> f32 accumulate
    h1 = jnp.dot(x_ref[...], w1_ref[...], preferred_element_type=jnp.float32) + b1_ref[...]
    h1 = jnp.maximum(h1, 0.0)
    # fc2 + relu: (tb, 64) @ (64, 16)
    h2 = jnp.dot(h1, w2_ref[...], preferred_element_type=jnp.float32) + b2_ref[...]
    h2 = jnp.maximum(h2, 0.0)
    # fc3: contract w3 (1, 16) with h2 (tb, 16) over features -> lane-dense (1, tb)
    q = lax.dot_general(
        w3_ref[...], h2,
        dimension_numbers=(((1,), (1,)), ((), ())),
        preferred_element_type=jnp.float32,
    )
    o_ref[...] = q + b3_ref[...]


def _choose_tile(B, tile_b):
    """Lane-aligned batch tile; >=2 tiles when the batch is splittable (v7x megacore)."""
    if B < 128:
        return B  # single exact tile; block dims == full array dims (always legal)
    tb = min(_round_up(tile_b, 128), (B // 128) * 128)  # never exceed the array
    if B >= 256 and pl.cdiv(B, tb) < 2:
        tb = _round_up(pl.cdiv(B, 2), 128)
    return tb


def qnetwork_forward(x, params, tile_b=8192):
    """x: [B, 83] float32 (or bfloat16) -> q_value: [B, 1] float32."""
    w1, b1, w2, b2, w3, b3 = params
    B, F = x.shape
    assert F == IN_F

    if x.dtype == jnp.bfloat16:
        # Only the x@w1 matmul streams per-row data; cast its (tiny) weight to bf16
        # so the dominant matmul runs native bf16 MXU.  Accumulation stays f32.
        w1 = w1.astype(jnp.bfloat16)

    tb = _choose_tile(B, tile_b)
    num_tiles = pl.cdiv(B, tb)
    out_lanes = num_tiles * tb  # output allocated padded; tail sliced off below

    flops = 2 * B * (IN_F * H1 + H1 * H2 + H2 * OUT_F)
    weight_bytes = 4 * (IN_F * H1 + H1 + H1 * H2 + H2 + H2 * OUT_F + OUT_F)
    bytes_accessed = x.dtype.itemsize * B * IN_F + 4 * B * OUT_F + weight_bytes

    out = pl.pallas_call(
        qnet_kernel,
        out_shape=jax.ShapeDtypeStruct((1, out_lanes), jnp.float32),
        grid=(num_tiles,),
        in_specs=[
            pl.BlockSpec((tb, IN_F), lambda i: (i, 0)),    # x tile (edge block padded)
            pl.BlockSpec((IN_F, H1), lambda i: (0, 0)),    # w1 (VMEM-resident)
            pl.BlockSpec((1, H1), lambda i: (0, 0)),       # b1
            pl.BlockSpec((H1, H2), lambda i: (0, 0)),      # w2
            pl.BlockSpec((1, H2), lambda i: (0, 0)),       # b2
            pl.BlockSpec((OUT_F, H2), lambda i: (0, 0)),   # w3 (PyTorch (out, in) layout)
            pl.BlockSpec((1, OUT_F), lambda i: (0, 0)),    # b3
        ],
        out_specs=pl.BlockSpec((1, tb), lambda i: (0, i)),
        compiler_params=pltpu.CompilerParams(
            dimension_semantics=("parallel",),
        ),
        cost_estimate=pl.CostEstimate(
            flops=flops, transcendentals=0, bytes_accessed=bytes_accessed),
    )(x, w1, b1, w2, b2, w3, b3)

    return out[0, :B].reshape(B, 1)


def init_params(key):
    """Deterministic init mimicking nn.Linear default (uniform(-1/sqrt(fan_in), ...))."""
    layer_specs = [
        ((IN_F, H1), (1, H1), IN_F),     # fc1 stored as (in, out)
        ((H1, H2), (1, H2), H1),         # fc2 stored as (in, out)
        ((OUT_F, H2), (1, OUT_F), H2),   # fc3 stored as (out, in) == PyTorch layout
    ]
    params = []
    for w_shape, b_shape, fan_in in layer_specs:
        kw, kb, key = jax.random.split(key, 3)
        bound = 1.0 / jnp.sqrt(float(fan_in))
        params.append(jax.random.uniform(kw, w_shape, jnp.float32, -bound, bound))
        params.append(jax.random.uniform(kb, b_shape, jnp.float32, -bound, bound))
    return tuple(params)


def reference_forward(x, params):
    w1, b1, w2, b2, w3, b3 = params
    h1 = jnp.maximum(x @ w1 + b1, 0.0)
    h2 = jnp.maximum(h1 @ w2 + b2, 0.0)
    return h2 @ w3.T + b3


if __name__ == "__main__":
    key = jax.random.PRNGKey(0)
    kx, kp, kx2, kx3 = jax.random.split(key, 4)
    params = init_params(kp)

    # Small demo batch (single exact tile, block dims == array dims).
    batch = 8
    state = jax.random.normal(kx, (batch, IN_F), jnp.float32)
    q = jax.block_until_ready(qnetwork_forward(state, params))
    ref = reference_forward(state, params)
    assert q.shape == (batch, 1)
    assert jnp.allclose(q, ref, atol=1e-5, rtol=1e-5), "mismatch vs JAX reference (small batch)"

    # Larger batch exercising the multi-tile grid + partial-edge-block path (no jnp.pad).
    batch2 = 1000
    state2 = jax.random.normal(kx2, (batch2, IN_F), jnp.float32)
    q2 = jax.block_until_ready(qnetwork_forward(state2, params, tile_b=512))
    ref2 = reference_forward(state2, params)
    assert q2.shape == (batch2, 1)
    assert jnp.allclose(q2, ref2, atol=1e-5, rtol=1e-5), "mismatch vs JAX reference (tiled batch)"

    # bf16 input path (caller-supplied bf16 x halves the dominant HBM read).
    batch3 = 256
    state3 = jax.random.normal(kx3, (batch3, IN_F), jnp.float32).astype(jnp.bfloat16)
    q3 = jax.block_until_ready(qnetwork_forward(state3, params))
    ref3 = reference_forward(state3.astype(jnp.float32), params)
    assert q3.shape == (batch3, 1)
    assert jnp.allclose(q3, ref3, atol=2e-2, rtol=0.0), "mismatch vs JAX reference (bf16 batch)"

    print("KERNEL_OK")
</pallas_src>

<mosaic_0001>
module attributes {stable_mosaic.version = 11 : i64} {
  func.func @qnet_kernel(%arg0: i32, %arg1: memref<8x83xf32, #tpu.memory_space<vmem>>, %arg2: memref<83x64xf32, #tpu.memory_space<vmem>>, %arg3: memref<1x64xf32, #tpu.memory_space<vmem>>, %arg4: memref<64x16xf32, #tpu.memory_space<vmem>>, %arg5: memref<1x16xf32, #tpu.memory_space<vmem>>, %arg6: memref<1x16xf32, #tpu.memory_space<vmem>>, %arg7: memref<1x1xf32, #tpu.memory_space<vmem>>, %arg8: memref<1x8xf32, #tpu.memory_space<vmem>>) attributes {dimension_semantics = [#tpu.dimension_semantics<parallel>], iteration_bounds = array<i64: 1>, scalar_prefetch = 0 : i64, scratch_operands = 0 : i64, tpu.core_type = #tpu.core_type<tc>, window_params = [{transform_indices = @transform_0, window_bounds = array<i64: 8, 83>}, {pipeline_mode = #tpu.pipeline_mode<synchronous>, transform_indices = @transform_1, window_bounds = array<i64: 83, 64>}, {pipeline_mode = #tpu.pipeline_mode<synchronous>, transform_indices = @transform_2, window_bounds = array<i64: 1, 64>}, {pipeline_mode = #tpu.pipeline_mode<synchronous>, transform_indices = @transform_3, window_bounds = array<i64: 64, 16>}, {pipeline_mode = #tpu.pipeline_mode<synchronous>, transform_indices = @transform_4, window_bounds = array<i64: 1, 16>}, {pipeline_mode = #tpu.pipeline_mode<synchronous>, transform_indices = @transform_5, window_bounds = array<i64: 1, 16>}, {pipeline_mode = #tpu.pipeline_mode<synchronous>, transform_indices = @transform_6, window_bounds = array<i64: 1, 1>}, {transform_indices = @transform_7, window_bounds = array<i64: 1, 8>}]} {
    %c0 = arith.constant 0 : index
    %c0_0 = arith.constant 0 : index
    %0 = vector.load %arg1[%c0, %c0_0] : memref<8x83xf32, #tpu.memory_space<vmem>>, vector<8x83xf32>
    %c0_1 = arith.constant 0 : index
    %c0_2 = arith.constant 0 : index
    %1 = vector.load %arg2[%c0_1, %c0_2] : memref<83x64xf32, #tpu.memory_space<vmem>>, vector<83x64xf32>
    %cst = arith.constant dense<0.000000e+00> : vector<8x64xf32>
    %2 = tpu.matmul %0, %1, %cst {dimension_numbers = #tpu.dot_dimension_numbers<[1], [0], [0], [1], [0, 0, 1, 1], [], []>} : vector<8x83xf32>, vector<83x64xf32>, vector<8x64xf32> -> vector<8x64xf32>
    %c0_3 = arith.constant 0 : index
    %c0_4 = arith.constant 0 : index
    %3 = vector.load %arg3[%c0_3, %c0_4] : memref<1x64xf32, #tpu.memory_space<vmem>>, vector<1x64xf32>
    %4 = vector.broadcast %3 : vector<1x64xf32> to vector<8x64xf32>
    %5 = arith.addf %2, %4 : vector<8x64xf32>
    %cst_5 = arith.constant 0.000000e+00 : f32
    %6 = vector.broadcast %cst_5 : f32 to vector<8x64xf32>
    %7 = arith.maximumf %5, %6 : vector<8x64xf32>
    %c0_6 = arith.constant 0 : index
    %c0_7 = arith.constant 0 : index
    %8 = vector.load %arg4[%c0_6, %c0_7] : memref<64x16xf32, #tpu.memory_space<vmem>>, vector<64x16xf32>
    %cst_8 = arith.constant dense<0.000000e+00> : vector<8x16xf32>
    %9 = tpu.matmul %7, %8, %cst_8 {dimension_numbers = #tpu.dot_dimension_numbers<[1], [0], [0], [1], [0, 0, 1, 1], [], []>} : vector<8x64xf32>, vector<64x16xf32>, vector<8x16xf32> -> vector<8x16xf32>
    %c0_9 = arith.constant 0 : index
    %c0_10 = arith.constant 0 : index
    %10 = vector.load %arg5[%c0_9, %c0_10] : memref<1x16xf32, #tpu.memory_space<vmem>>, vector<1x16xf32>
    %11 = vector.broadcast %10 : vector<1x16xf32> to vector<8x16xf32>
    %12 = arith.addf %9, %11 : vector<8x16xf32>
    %cst_11 = arith.constant 0.000000e+00 : f32
    %13 = vector.broadcast %cst_11 : f32 to vector<8x16xf32>
    %14 = arith.maximumf %12, %13 : vector<8x16xf32>
    %c0_12 = arith.constant 0 : index
    %c0_13 = arith.constant 0 : index
    %15 = vector.load %arg6[%c0_12, %c0_13] : memref<1x16xf32, #tpu.memory_space<vmem>>, vector<1x16xf32>
    %cst_14 = arith.constant dense<0.000000e+00> : vector<1x8xf32>
    %16 = tpu.matmul %15, %14, %cst_14 {dimension_numbers = #tpu.dot_dimension_numbers<[1], [1], [0], [0], [0, 0, 1, 0], [], []>} : vector<1x16xf32>, vector<8x16xf32>, vector<1x8xf32> -> vector<1x8xf32>
    %c0_15 = arith.constant 0 : index
    %c0_16 = arith.constant 0 : index
    %17 = vector.load %arg7[%c0_15, %c0_16] : memref<1x1xf32, #tpu.memory_space<vmem>>, vector<1x1xf32>
    %18 = vector.broadcast %17 : vector<1x1xf32> to vector<1x8xf32>
    %19 = arith.addf %16, %18 : vector<1x8xf32>
    %c0_17 = arith.constant 0 : index
    %c0_18 = arith.constant 0 : index
    %20 = vector.load %arg8[%c0_17, %c0_18] : memref<1x8xf32, #tpu.memory_space<vmem>>, vector<1x8xf32>
    tpu.vector_store %arg8[%c0_17, %c0_18], %19 {strides = array<i32>} : memref<1x8xf32, #tpu.memory_space<vmem>>, vector<1x8xf32>,
    return
  }
  func.func @transform_0(%arg0: i32) -> (i32, i32) {
    %c0_i32 = arith.constant 0 : i32
    %c0_i32_0 = arith.constant 0 : i32
    return %arg0, %c0_i32 : i32, i32
  }
  func.func @transform_1(%arg0: i32) -> (i32, i32) {
    %c0_i32 = arith.constant 0 : i32
    %c0_i32_0 = arith.constant 0 : i32
    %c0_i32_1 = arith.constant 0 : i32
    return %c0_i32, %c0_i32_0 : i32, i32
  }
  func.func @transform_2(%arg0: i32) -> (i32, i32) {
    %c0_i32 = arith.constant 0 : i32
    %c0_i32_0 = arith.constant 0 : i32
    %c0_i32_1 = arith.constant 0 : i32
    return %c0_i32, %c0_i32_0 : i32, i32
  }
  func.func @transform_3(%arg0: i32) -> (i32, i32) {
    %c0_i32 = arith.constant 0 : i32
    %c0_i32_0 = arith.constant 0 : i32
    %c0_i32_1 = arith.constant 0 : i32
    return %c0_i32, %c0_i32_0 : i32, i32
  }
  func.func @transform_4(%arg0: i32) -> (i32, i32) {
    %c0_i32 = arith.constant 0 : i32
    %c0_i32_0 = arith.constant 0 : i32
    %c0_i32_1 = arith.constant 0 : i32
    return %c0_i32, %c0_i32_0 : i32, i32
  }
  func.func @transform_5(%arg0: i32) -> (i32, i32) {
    %c0_i32 = arith.constant 0 : i32
    %c0_i32_0 = arith.constant 0 : i32
    %c0_i32_1 = arith.constant 0 : i32
    return %c0_i32, %c0_i32_0 : i32, i32
  }
  func.func @transform_6(%arg0: i32) -> (i32, i32) {
    %c0_i32 = arith.constant 0 : i32
    %c0_i32_0 = arith.constant 0 : i32
    %c0_i32_1 = arith.constant 0 : i32
    return %c0_i32, %c0_i32_0 : i32, i32
  }
  func.func @transform_7(%arg0: i32) -> (i32, i32) {
    %c0_i32 = arith.constant 0 : i32
    %c0_i32_0 = arith.constant 0 : i32
    return %c0_i32, %arg0 : i32, i32
  }
}

</mosaic_0001>

<llo_original>
// kernel: tpu_custom_call.1
$region0: #{tpu_custom_call.1}
  #allocation0 [shape = 'u32[]', space=smem, size = 0x4, offset = 0x4, fixed_abs, tag = 'smem constant byte address 0x4 - core index']
  #allocation1 [shape = 'u32[144,128]{1,0:T(1,128)}', space=vmem, size = 0x12000, scoped, tag = 'internal scratch']
  #allocation2 [shape = 'f32[1,1]{1,0:T(1,128)S(1)}', space=vmem, size = 0x200, scoped, tag = 'scoped memory for tpu_custom_call.1']
  %s0 = inlined_call_operand.vmem [shape: f32[8,83], index: 0, kind: input, shape index: {}]
  %s1 = inlined_call_operand.vmem [shape: f32[83,64], index: 1, kind: input, shape index: {}]
  %s2 = inlined_call_operand.vmem [shape: f32[1,64], index: 2, kind: input, shape index: {}]
  %s3 = inlined_call_operand.vmem [shape: f32[64,16], index: 3, kind: input, shape index: {}]
  %s4 = inlined_call_operand.vmem [shape: f32[1,16], index: 4, kind: input, shape index: {}]
  %s5 = inlined_call_operand.vmem [shape: f32[1,16], index: 5, kind: input, shape index: {}]
  %s6 = inlined_call_operand.<no memory space> [shape: f32[1,1], index: 6, kind: input, shape index: {}]
  %s7 = inlined_call_operand.hbm [shape: f32[1,8], index: 7, kind: output, shape index: {}]
  %s8 = sld [smem:[#allocation0]]
  $region38: #{tpu_custom_call.1} parent=0
    _
  %s10 = ssub.s32 1, %s8
  %s11 = scalar_select 0, %s10, %s8
  %v12 = vstv %s6
  %13 = vst [vmem:[#allocation2] sm:$0x1] %v12
  $region1: #{tpu_custom_call.1} parent=0
    #allocation3 [shape = 'u8[512]{0}', space=vmem, size = 0x400, scoped, tag = 'output window, operand 0, single buffered']
    #allocation4 [shape = 's32[1]{0}', space=sflag, size = 0x4, scoped, tag = 'scoped memory for tpu_custom_call.1']
    %14 = vsyncpa [#allocation4], 0
    // Predicated region
    $region2: #{tpu_custom_call.1} parent=1 // pred_check
      _
    $region3: #{tpu_custom_call.1} parent=1 // pred_check_branch
      %16 = sbr.rel (0) target = $region5
    $region4: #{tpu_custom_call.1} parent=1 // pred_region
      _
    $region5: #{tpu_custom_call.1} parent=1 // pred_fallthru
      _
    // Predicated region
    $region6: #{tpu_custom_call.1} parent=1 // pred_check
      _
    $region7: #{tpu_custom_call.1} parent=1 // pred_check_branch
      %18 = sbr.rel (0) target = $region9
    $region8: #{tpu_custom_call.1} parent=1 // pred_region
      _
    $region9: #{tpu_custom_call.1} parent=1 // pred_fallthru
      _
    // Predicated region
    $region10: #{tpu_custom_call.1} parent=1 // pred_check
      _
    $region11: #{tpu_custom_call.1} parent=1 // pred_check_branch
      %20 = sbr.rel (0) target = $region13
    $region12: #{tpu_custom_call.1} parent=1 // pred_region
      _
    $region13: #{tpu_custom_call.1} parent=1 // pred_fallthru
      _
    // Predicated region
    $region14: #{tpu_custom_call.1} parent=1 // pred_check
      _
    $region15: #{tpu_custom_call.1} parent=1 // pred_check_branch
      %22 = sbr.rel (0) target = $region17
    $region16: #{tpu_custom_call.1} parent=1 // pred_region
      _
    $region17: #{tpu_custom_call.1} parent=1 // pred_fallthru
      _
    // Predicated region
    $region18: #{tpu_custom_call.1} parent=1 // pred_check
      _
    $region19: #{tpu_custom_call.1} parent=1 // pred_check_branch
      %24 = sbr.rel (0) target = $region21
    $region20: #{tpu_custom_call.1} parent=1 // pred_region
      _
    $region21: #{tpu_custom_call.1} parent=1 // pred_fallthru
      _
    // Predicated region
    $region22: #{tpu_custom_call.1} parent=1 // pred_check
      _
    $region23: #{tpu_custom_call.1} parent=1 // pred_check_branch
      %26 = sbr.rel (0) target = $region25
    $region24: #{tpu_custom_call.1} parent=1 // pred_region
      _
    $region25: #{tpu_custom_call.1} parent=1 // pred_fallthru
      _
    // Predicated region
    $region26: #{tpu_custom_call.1} parent=1 // pred_check
      _
    $region27: #{tpu_custom_call.1} parent=1 // pred_check_branch
      %28 = sbr.rel (0) target = $region29
    $region28: #{tpu_custom_call.1} parent=1 // pred_region
      _
    $region29: #{tpu_custom_call.1} parent=1 // pred_fallthru
      _
    %v29 = vld [vmem:[%s0] sm:$0xff]
    %v30 = vld [vmem:[%s1] sm:$0xff]
    %v31 = vld [vmem:[%s1 + $0x8] sm:$0xff]
    %v32 = vld [vmem:[%s1 + $0x10] sm:$0xff]
    %v33 = vld [vmem:[%s1 + $0x18] sm:$0xff]
    %v34 = vld [vmem:[%s1 + $0x20] sm:$0xff]
    %v35 = vld [vmem:[%s1 + $0x28] sm:$0xff]
    %v36 = vld [vmem:[%s1 + $0x30] sm:$0xff]
    %v37 = vld [vmem:[%s1 + $0x38] sm:$0xff]
    %v38 = vld [vmem:[%s1 + $0x40] sm:$0xff]
    %v39 = vld [vmem:[%s1 + $0x48] sm:$0xff]
    %v40 = vld [vmem:[%s1 + $0x50] sm:$0x7]
    %v41 = vld [vmem:[%s2] sm:$0x1]
    %v43 = vlaneseq
    %v44 = vshrl.u32 %v43, 7
    %v45 = vsub.s32 0, %v44
    %v46 = vrot.slane %v41, %v45
    %vm48 = vcmask 678912
    %v50 = vsel %vm48, %v29, 0
    %vm52 = vcmask 1042432
    %v54 = vsel %vm52, %v40, 0
    %56 = vmatprep.subr.mxu0 0.0
    %57 = vmatpush1.msra.mxu0 %v30
    %58 = vmatprep.subr.mxu0 0.0
    %59 = vmatpush1.msra.mxu0 %v31
    %60 = vmatprep.subr.mxu0 0.0
    %61 = vmatpush1.msra.mxu0 %v32
    %62 = vmatprep.subr.mxu0 0.0
    %63 = vmatpush1.msra.mxu0 %v33
    %64 = vmatprep.subr.mxu0 0.0
    %65 = vmatpush1.msra.mxu0 %v34
    %66 = vmatprep.subr.mxu0 0.0
    %67 = vmatpush1.msra.mxu0 %v35
    %68 = vmatprep.subr.mxu0 0.0
    %69 = vmatpush1.msra.mxu0 %v36
    %70 = vmatprep.subr.mxu0 0.0
    %71 = vmatpush1.msra.mxu0 %v37
    %72 = vmatprep.subr.mxu0 0.0
    %73 = vmatpush1.msra.mxu0 %v38
    %74 = vmatprep.subr.mxu0 0.0
    %75 = vmatpush1.msra.mxu0 %v39
    %76 = vmatprep.subr.mxu0 0.0
    %77 = vmatpush1.msra.mxu0 %v54
    %78 = vmatprep.subr.mxu0 0.0
    %79 = vmatpush1.msra.mxu0 0.0
    %80 = vmatprep.subr.mxu0 0.0
    %81 = vmatpush1.msra.mxu0 0.0
    %82 = vmatprep.subr.mxu0 0.0
    %83 = vmatpush1.msra.mxu0 0.0
    %84 = vmatprep.subr.mxu0 0.0
    %85 = vmatpush1.msra.mxu0 0.0
    %86 = vmatprep.subr.mxu0 0.0
    %87 = vmatpush1.msra.mxu0 0.0
    %88 = vmatprep.subr.mxu0 0.0
    %89 = vmatpush1.msra.mxu0 0.0
    %90 = vmatprep.subr.mxu0 0.0
    %91 = vmatpush1.msra.mxu0 0.0
    %92 = vmatprep.subr.mxu0 0.0
    %93 = vmatpush1.msra.mxu0 0.0
    %94 = vmatprep.subr.mxu0 0.0
    %95 = vmatpush1.msra.mxu0 0.0
    %96 = vmatprep.subr.mxu0 0.0
    %97 = vmatpush1.msra.mxu0 0.0
    %98 = vmatprep.subr.mxu0 0.0
    %99 = vmatpush1.msra.mxu0 0.0
    %100 = vmatprep.subr.mxu0 0.0
    %101 = vmatpush1.msra.mxu0 0.0
    %102 = vmatprep.subr.mxu0 0.0
    %103 = vmatpush1.msra.mxu0 0.0
    %104 = vmatprep.subr.mxu0 0.0
    %105 = vmatpush1.msra.mxu0 0.0
    %106 = vmatprep.subr.mxu0 0.0
    %107 = vmatpush1.msra.mxu0 0.0
    %108 = vmatprep.subr.mxu0 0.0
    %109 = vmatpush1.msra.mxu0 0.0
    %110 = vmatprep.subr.mxu0 0.0
    %111 = vmatpush1.msra.mxu0 0.0
    %112 = vmatprep.subr.mxu0 0.0
    %113 = vmatpush1.msra.mxu0 0.0
    %114 = vmatprep.subr.mxu0 0.0
    %115 = vmatpush1.msra.mxu0 0.0
    %116 = vmatprep.subr.mxu0 0.0
    %117 = vmatpush1.msra.mxu0 0.0
    %118 = vmatprep.subr.mxu0 0.0
    %119 = vmatpush1.msra.mxu0 0.0
    %120 = vmatprep.mubr.f32.mxu0 0.0
    %121 = vmatmul.mubr.f32.gmra.mrb[0].mxu0 %v50
    %v122 = vpop.f32.mrb[0].mxu0
    %v123 = vadd.f32 %v46, %v122
    %v124 = vpop.f32.mrb[0].mxu0
    %125 = vdwg.mxu0
    %v126 = vmax.f32 %v123, 0.0
    %v127 = vld [vmem:[%s3] sm:$0xff]
    %v128 = vld [vmem:[%s3 + $0x8] sm:$0xff]
    %v129 = vld [vmem:[%s3 + $0x10] sm:$0xff]
    %v130 = vld [vmem:[%s3 + $0x18] sm:$0xff]
    %v131 = vld [vmem:[%s3 + $0x20] sm:$0xff]
    %v132 = vld [vmem:[%s3 + $0x28] sm:$0xff]
    %v133 = vld [vmem:[%s3 + $0x30] sm:$0xff]
    %v134 = vld [vmem:[%s3 + $0x38] sm:$0xff]
    %v135 = vld [vmem:[%s4] sm:$0x1]
    %v137 = vlaneseq
    %v138 = vshrl.u32 %v137, 7
    %v139 = vsub.s32 0, %v138
    %v140 = vrot.slane %v135, %v139
    %vm142 = vcmask 523264
    %v144 = vsel %vm142, %v126, 0
    %146 = vmatprep.subr.mxu0 0.0
    %147 = vmatpush1.msra.mxu0 %v127
    %148 = vmatprep.subr.mxu0 0.0
    %149 = vmatpush1.msra.mxu0 %v128
    %150 = vmatprep.subr.mxu0 0.0
    %151 = vmatpush1.msra.mxu0 %v129
    %152 = vmatprep.subr.mxu0 0.0
    %153 = vmatpush1.msra.mxu0 %v130
    %154 = vmatprep.subr.mxu0 0.0
    %155 = vmatpush1.msra.mxu0 %v131
    %156 = vmatprep.subr.mxu0 0.0
    %157 = vmatpush1.msra.mxu0 %v132
    %158 = vmatprep.subr.mxu0 0.0
    %159 = vmatpush1.msra.mxu0 %v133
    %160 = vmatprep.subr.mxu0 0.0
    %161 = vmatpush1.msra.mxu0 %v134
    %162 = vmatprep.subr.mxu0 0.0
    %163 = vmatpush1.msra.mxu0 0.0
    %164 = vmatprep.subr.mxu0 0.0
    %165 = vmatpush1.msra.mxu0 0.0
    %166 = vmatprep.subr.mxu0 0.0
    %167 = vmatpush1.msra.mxu0 0.0
    %168 = vmatprep.subr.mxu0 0.0
    %169 = vmatpush1.msra.mxu0 0.0
    %170 = vmatprep.subr.mxu0 0.0
    %171 = vmatpush1.msra.mxu0 0.0
    %172 = vmatprep.subr.mxu0 0.0
    %173 = vmatpush1.msra.mxu0 0.0
    %174 = vmatprep.subr.mxu0 0.0
    %175 = vmatpush1.msra.mxu0 0.0
    %176 = vmatprep.subr.mxu0 0.0
    %177 = vmatpush1.msra.mxu0 0.0
    %178 = vmatprep.subr.mxu0 0.0
    %179 = vmatpush1.msra.mxu0 0.0
    %180 = vmatprep.subr.mxu0 0.0
    %181 = vmatpush1.msra.mxu0 0.0
    %182 = vmatprep.subr.mxu0 0.0
    %183 = vmatpush1.msra.mxu0 0.0
    %184 = vmatprep.subr.mxu0 0.0
    %185 = vmatpush1.msra.mxu0 0.0
    %186 = vmatprep.subr.mxu0 0.0
    %187 = vmatpush1.msra.mxu0 0.0
    %188 = vmatprep.subr.mxu0 0.0
    %189 = vmatpush1.msra.mxu0 0.0
    %190 = vmatprep.subr.mxu0 0.0
    %191 = vmatpush1.msra.mxu0 0.0
    %192 = vmatprep.subr.mxu0 0.0
    %193 = vmatpush1.msra.mxu0 0.0
    %194 = vmatprep.subr.mxu0 0.0
    %195 = vmatpush1.msra.mxu0 0.0
    %196 = vmatprep.subr.mxu0 0.0
    %197 = vmatpush1.msra.mxu0 0.0
    %198 = vmatprep.subr.mxu0 0.0
    %199 = vmatpush1.msra.mxu0 0.0
    %200 = vmatprep.subr.mxu0 0.0
    %201 = vmatpush1.msra.mxu0 0.0
    %202 = vmatprep.subr.mxu0 0.0
    %203 = vmatpush1.msra.mxu0 0.0
    %204 = vmatprep.subr.mxu0 0.0
    %205 = vmatpush1.msra.mxu0 0.0
    %206 = vmatprep.subr.mxu0 0.0
    %207 = vmatpush1.msra.mxu0 0.0
    %208 = vmatprep.subr.mxu0 0.0
    %209 = vmatpush1.msra.mxu0 0.0
    %210 = vmatprep.mubr.f32.mxu0 0.0
    %211 = vmatmul.mubr.f32.gmra.mrb[0].mxu0 %v144
    %v212 = vpop.f32.mrb[0].mxu0
    %v213 = vadd.f32 %v140, %v212
    %v214 = vpop.f32.mrb[0].mxu0
    %215 = vdwg.mxu0
    %v216 = vmax.f32 %v213, 0.0
    %v217 = vld [vmem:[%s5] sm:$0x1]
    %v218 = vld [vmem:[#allocation2] sm:$0x1]
    %220 = vset.pattern.permute.xlu0 0
    %221 = vperm.xlu0 %220, %v218
    %v222 = vpop.permute.xlu0 %221
    %v224 = vlaneseq
    %v225 = vshrl.u32 %v224, 7
    %v226 = vsub.s32 0, %v225
    %v227 = vrot.slane %v222, %v226
    %vm228 = vcmask 130048
    %v230 = vsel %vm228, %v217, 0
    %v233 = vsel %vm228, %v216, 0
    %235 = vmatprep.subr.mxu0 0.0
    %236 = vmatpush1.xpose.msra.mxu0 %v233
    %237 = vmatprep.subr.mxu0 0.0
    %238 = vmatpush1.xpose.msra.mxu0 0.0
    %239 = vmatprep.subr.mxu0 0.0
    %240 = vmatpush1.xpose.msra.mxu0 0.0
    %241 = vmatprep.subr.mxu0 0.0
    %242 = vmatpush1.xpose.msra.mxu0 0.0
    %243 = vmatprep.subr.mxu0 0.0
    %244 = vmatpush1.xpose.msra.mxu0 0.0
    %245 = vmatprep.subr.mxu0 0.0
    %246 = vmatpush1.xpose.msra.mxu0 0.0
    %247 = vmatprep.subr.mxu0 0.0
    %248 = vmatpush1.xpose.msra.mxu0 0.0
    %249 = vmatprep.subr.mxu0 0.0
    %250 = vmatpush1.xpose.msra.mxu0 0.0
    %251 = vmatprep.subr.mxu0 0.0
    %252 = vmatpush1.xpose.msra.mxu0 0.0
    %253 = vmatprep.subr.mxu0 0.0
    %254 = vmatpush1.xpose.msra.mxu0 0.0
    %255 = vmatprep.subr.mxu0 0.0
    %256 = vmatpush1.xpose.msra.mxu0 0.0
    %257 = vmatprep.subr.mxu0 0.0
    %258 = vmatpush1.xpose.msra.mxu0 0.0
    %259 = vmatprep.subr.mxu0 0.0
    %260 = vmatpush1.xpose.msra.mxu0 0.0
    %261 = vmatprep.subr.mxu0 0.0
    %262 = vmatpush1.xpose.msra.mxu0 0.0
    %263 = vmatprep.subr.mxu0 0.0
    %264 = vmatpush1.xpose.msra.mxu0 0.0
    %265 = vmatprep.subr.mxu0 0.0
    %266 = vmatpush1.xpose.msra.mxu0 0.0
    %267 = vmatprep.subr.mxu0 0.0
    %268 = vmatpush1.xpose.msra.mxu0 0.0
    %269 = vmatprep.subr.mxu0 0.0
    %270 = vmatpush1.xpose.msra.mxu0 0.0
    %271 = vmatprep.subr.mxu0 0.0
    %272 = vmatpush1.xpose.msra.mxu0 0.0
    %273 = vmatprep.subr.mxu0 0.0
    %274 = vmatpush1.xpose.msra.mxu0 0.0
    %275 = vmatprep.subr.mxu0 0.0
    %276 = vmatpush1.xpose.msra.mxu0 0.0
    %277 = vmatprep.subr.mxu0 0.0
    %278 = vmatpush1.xpose.msra.mxu0 0.0
    %279 = vmatprep.subr.mxu0 0.0
    %280 = vmatpush1.xpose.msra.mxu0 0.0
    %281 = vmatprep.subr.mxu0 0.0
    %282 = vmatpush1.xpose.msra.mxu0 0.0
    %283 = vmatprep.subr.mxu0 0.0
    %284 = vmatpush1.xpose.msra.mxu0 0.0
    %285 = vmatprep.subr.mxu0 0.0
    %286 = vmatpush1.xpose.msra.mxu0 0.0
    %287 = vmatprep.subr.mxu0 0.0
    %288 = vmatpush1.xpose.msra.mxu0 0.0
    %289 = vmatprep.subr.mxu0 0.0
    %290 = vmatpush1.xpose.msra.mxu0 0.0
    %291 = vmatprep.subr.mxu0 0.0
    %292 = vmatpush1.xpose.msra.mxu0 0.0
    %293 = vmatprep.subr.mxu0 0.0
    %294 = vmatpush1.xpose.msra.mxu0 0.0
    %295 = vmatprep.subr.mxu0 0.0
    %296 = vmatpush1.xpose.msra.mxu0 0.0
    %297 = vmatprep.subr.mxu0 0.0
    %298 = vmatpush1.xpose.msra.mxu0 0.0
    %299 = vmatprep.mubr.f32.mxu0 0.0
    %300 = vmatmul.mubr.f32.gmra.mrb[0].mxu0 %v230
    %v301 = vpop.f32.mrb[0].mxu0
    %v302 = vadd.f32 %v227, %v301
    %v303 = vpop.f32.mrb[0].mxu0
    %304 = vdwg.mxu0
    %vm305 = vcmask 57344
    %306 = vst.msk [vmem:[#allocation3] sm:$0x1] %vm305, %v302
    // Predicated region
    $region30: #{tpu_custom_call.1} parent=1 // pred_check
      _
    $region31: #{tpu_custom_call.1} parent=1 // pred_check_branch
      %308 = sbr.rel (0) target = $region33
    $region32: #{tpu_custom_call.1} parent=1 // pred_region
      %s310 = ssub.s32 16, 16
      %311 = vsyncadd [#allocation4], %s310
      %s313 = sshll.u32 [#allocation3], 4
      %s314 = int_to_ptr.vmem [resolvable:$true] %s313
      %316 = dma.vmem_to_hbm [thread:$0]  %s314, 16, %s7, [#allocation4]
    $region33: #{tpu_custom_call.1} parent=1 // pred_fallthru
      _
    // Predicated region
    $region34: #{tpu_custom_call.1} parent=1 // pred_check
      _
    $region35: #{tpu_custom_call.1} parent=1 // pred_check_branch
      %318 = sbr.rel (0) target = $region37
    $region36: #{tpu_custom_call.1} parent=1 // pred_region
      %319 = dma.done [#allocation4], 16
    $region37: #{tpu_custom_call.1} parent=1 // pred_fallthru
      _
    %320 = vsyncpa [#allocation4], 1

</llo_original>
